<compile_context>
chip_gen: v5e
topology: v5e:2x2
jax: 0.10.0
libtpu: 0.0.40
codegen_flags: <defaults>
</compile_context>

<pallas_src>
import functools

import jax
import jax.numpy as jnp
from jax.experimental import pallas as pl
from jax.experimental.pallas import tpu as pltpu


def _round_up(v, m):
    return ((v + m - 1) // m) * m


def _vmem_capacity_bytes():
    """Best-effort physical VMEM query; conservative (v7x-sized) fallback."""
    try:
        cap = getattr(pltpu.get_tpu_info(), "vmem_capacity_bytes", None)
        if cap:
            return int(cap)
    except Exception:
        pass
    return 64 * 1024 * 1024


# ---------------------------------------------------------------------------
# Kernel bodies
# ---------------------------------------------------------------------------

def _simam_rows_kernel(x_ref, o_ref, *, inv_hw, four_over_n, four_lambda):
    """Full-row tiles: each block holds `tile_rows` complete (b, c) rows."""
    x = x_ref[...].astype(jnp.float32)

    # Single-pass statistics over the true H*W lanes (block lane extent is the
    # full H*W, so no padding correction is needed).
    sum_x = jnp.sum(x, axis=-1, keepdims=True)
    sum_xx = jnp.sum(x * x, axis=-1, keepdims=True)

    mu = sum_x * inv_hw                    # spatial mean
    s = sum_xx - mu * sum_x                # sum((x - mu)^2)

    # denom = 4 * (s / n + lambda); constants folded on the host.
    denom = s * four_over_n + four_lambda
    # Exact divide: only `tile_rows` values per block, cost is nil in this
    # HBM-bound kernel, and it keeps numerics tight vs. the reference.
    inv_denom = pl.reciprocal(denom, approx=False)

    d = x - mu
    y = d * d * inv_denom + 0.5
    o_ref[...] = (x * jax.nn.sigmoid(y)).astype(o_ref.dtype)


def _simam_stats_kernel(x_ref, mu_ref, invd_ref, sum_sc, ssq_sc, *,
                        hw, lane_tile, mask_lanes, inv_hw, four_over_n,
                        four_lambda):
    """Pass 1 of the lane-chunked path: accumulate per-row sum / sumsq."""
    l = pl.program_id(1)

    @pl.when(l == 0)
    def _():
        sum_sc[...] = jnp.zeros_like(sum_sc)
        ssq_sc[...] = jnp.zeros_like(ssq_sc)

    x = x_ref[...].astype(jnp.float32)
    if mask_lanes:
        # Mask the ragged last lane chunk so garbage lanes don't pollute sums.
        lane_idx = l * lane_tile + jax.lax.broadcasted_iota(jnp.int32, x.shape, 1)
        x = jnp.where(lane_idx < hw, x, 0.0)

    sum_sc[...] += jnp.sum(x, axis=-1, keepdims=True)
    ssq_sc[...] += jnp.sum(x * x, axis=-1, keepdims=True)

    @pl.when(l == pl.num_programs(1) - 1)
    def _():
        sum_x = sum_sc[...]
        mu = sum_x * inv_hw
        s = ssq_sc[...] - mu * sum_x
        denom = s * four_over_n + four_lambda
        mu_ref[...] = mu
        invd_ref[...] = pl.reciprocal(denom, approx=False)


def _simam_apply_kernel(x_ref, mu_ref, invd_ref, o_ref):
    """Pass 2 of the lane-chunked path: elementwise output."""
    x = x_ref[...].astype(jnp.float32)
    d = x - mu_ref[...]
    y = d * d * invd_ref[...] + 0.5
    o_ref[...] = (x * jax.nn.sigmoid(y)).astype(o_ref.dtype)


# ---------------------------------------------------------------------------
# Host wrappers
# ---------------------------------------------------------------------------

def _simam_chunked(x2d, *, sublane, itemsize, target_block_bytes,
                   vmem_limit_bytes, inv_hw, four_over_n, four_lambda):
    """Lane-chunked two-pass path for very large H*W (VMEM guard)."""
    bc, hw = x2d.shape
    dtype = x2d.dtype

    tile_rows = bc if bc < sublane else sublane
    lane_tile = max(128, (target_block_bytes // (tile_rows * itemsize)) // 128 * 128)
    lane_tile = min(lane_tile, max(128, (hw // 128) * 128))
    grid_rows = pl.cdiv(bc, tile_rows)
    grid_lanes = pl.cdiv(hw, lane_tile)
    mask_lanes = (hw % lane_tile) != 0

    stats_kernel = functools.partial(
        _simam_stats_kernel,
        hw=hw, lane_tile=lane_tile, mask_lanes=mask_lanes,
        inv_hw=inv_hw, four_over_n=four_over_n, four_lambda=four_lambda)

    mu, inv_denom = pl.pallas_call(
        stats_kernel,
        out_shape=(jax.ShapeDtypeStruct((bc, 1), jnp.float32),
                   jax.ShapeDtypeStruct((bc, 1), jnp.float32)),
        grid_spec=pltpu.PrefetchScalarGridSpec(
            num_scalar_prefetch=0,
            grid=(grid_rows, grid_lanes),
            in_specs=[pl.BlockSpec((tile_rows, lane_tile), lambda r, l: (r, l))],
            out_specs=[pl.BlockSpec((tile_rows, 1), lambda r, l: (r, 0)),
                       pl.BlockSpec((tile_rows, 1), lambda r, l: (r, 0))],
            scratch_shapes=[pltpu.VMEM((tile_rows, 1), jnp.float32),
                            pltpu.VMEM((tile_rows, 1), jnp.float32)],
        ),
        compiler_params=pltpu.CompilerParams(
            dimension_semantics=("parallel", "arbitrary"),
            vmem_limit_bytes=vmem_limit_bytes,
        ),
        cost_estimate=pl.CostEstimate(
            flops=3 * bc * hw,
            transcendentals=0,
            bytes_accessed=bc * hw * itemsize + 2 * bc * 4,
        ),
    )(x2d)

    out2d = pl.pallas_call(
        _simam_apply_kernel,
        out_shape=jax.ShapeDtypeStruct((bc, hw), dtype),
        grid_spec=pltpu.PrefetchScalarGridSpec(
            num_scalar_prefetch=0,
            grid=(grid_rows, grid_lanes),
            in_specs=[pl.BlockSpec((tile_rows, lane_tile), lambda r, l: (r, l)),
                      pl.BlockSpec((tile_rows, 1), lambda r, l: (r, 0)),
                      pl.BlockSpec((tile_rows, 1), lambda r, l: (r, 0))],
            out_specs=pl.BlockSpec((tile_rows, lane_tile), lambda r, l: (r, l)),
        ),
        compiler_params=pltpu.CompilerParams(
            dimension_semantics=("parallel", "parallel"),
            vmem_limit_bytes=vmem_limit_bytes,
        ),
        cost_estimate=pl.CostEstimate(
            flops=6 * bc * hw,
            transcendentals=bc * hw,
            bytes_accessed=2 * bc * hw * itemsize + 2 * bc * 4,
        ),
    )(x2d, mu, inv_denom)
    return out2d


def simam(x, e_lambda=0.1, target_block_bytes=None, vmem_limit_bytes=None):
    """SimAM forward pass. x: (B, C, H, W), any float dtype."""
    b, c, h, w = x.shape
    bc = b * c
    hw = h * w
    dtype = x.dtype
    itemsize = jnp.dtype(dtype).itemsize
    sublane = max(8, 32 // itemsize)       # 8 (f32) / 16 (bf16) / 32 (i8/fp8)

    vmem_cap = _vmem_capacity_bytes()
    big_vmem = vmem_cap >= 100 * 1024 * 1024   # v5e / v6e (128 MiB VMEM)
    two_tc = not big_vmem                      # v7x heuristic (64 MiB, 2 TCs)

    if target_block_bytes is None:
        target_block_bytes = (4 if big_vmem else 2) * 1024 * 1024
    if vmem_limit_bytes is None:
        vmem_limit_bytes = (64 if big_vmem else 40) * 1024 * 1024

    n = float(hw - 1)
    inv_hw = 1.0 / float(hw)
    # hw == 1 degenerates to NaN exactly like the PyTorch reference (0/0).
    four_over_n = (4.0 / n) if n > 0.0 else float("inf")
    four_lambda = 4.0 * float(e_lambda)

    x2d = x.reshape(bc, hw)                # contiguous bitcast reshape, no copy
    row_bytes = hw * itemsize

    # Very large spatial maps: a minimal full-row block would exceed the block
    # budget (and risk VMEM OOM, esp. on v7x) -> lane-chunked two-pass path.
    if sublane * row_bytes > target_block_bytes:
        out2d = _simam_chunked(
            x2d, sublane=sublane, itemsize=itemsize,
            target_block_bytes=target_block_bytes,
            vmem_limit_bytes=vmem_limit_bytes,
            inv_hw=inv_hw, four_over_n=four_over_n, four_lambda=four_lambda)
        return out2d.reshape(b, c, h, w)

    # ---- full-row path (common case) ---------------------------------------
    tile_rows = target_block_bytes // row_bytes
    if tile_rows >= bc:
        tile_rows = bc                     # single block: full dims, always legal
    else:
        tile_rows = max(sublane, (tile_rows // sublane) * sublane)
    grid_rows = pl.cdiv(bc, tile_rows)

    if two_tc:
        # Balance work across the two TensorCores (>= 2, even number of steps).
        if grid_rows == 1 and bc >= 2 * sublane:
            tile_rows = _round_up(pl.cdiv(bc, 2), sublane)
            grid_rows = pl.cdiv(bc, tile_rows)
        elif grid_rows > 1 and grid_rows % 2 == 1:
            alt = _round_up(pl.cdiv(bc, grid_rows + 1), sublane)
            if pl.cdiv(bc, alt) % 2 == 0:
                tile_rows = alt
                grid_rows = pl.cdiv(bc, tile_rows)

    kernel = functools.partial(
        _simam_rows_kernel,
        inv_hw=inv_hw, four_over_n=four_over_n, four_lambda=four_lambda)

    out2d = pl.pallas_call(
        kernel,
        out_shape=jax.ShapeDtypeStruct((bc, hw), dtype),
        grid_spec=pltpu.PrefetchScalarGridSpec(
            num_scalar_prefetch=0,
            grid=(grid_rows,),
            in_specs=[pl.BlockSpec((tile_rows, hw), lambda i: (i, 0))],
            out_specs=pl.BlockSpec((tile_rows, hw), lambda i: (i, 0)),
        ),
        compiler_params=pltpu.CompilerParams(
            dimension_semantics=("parallel",),
            vmem_limit_bytes=vmem_limit_bytes,
        ),
        cost_estimate=pl.CostEstimate(
            flops=8 * bc * hw,
            transcendentals=bc * hw,        # sigmoid exp
            bytes_accessed=2 * bc * hw * itemsize,
        ),
    )(x2d)
    return out2d.reshape(b, c, h, w)


def simam_ref(x, e_lambda=0.1):
    """Pure-JAX reference mirroring the PyTorch forward exactly."""
    b, c, h, w = x.shape
    n = w * h - 1
    mu = jnp.mean(x, axis=(2, 3), keepdims=True)
    d2 = (x - mu) ** 2
    y = d2 / (4.0 * (jnp.sum(d2, axis=(2, 3), keepdims=True) / n + e_lambda)) + 0.5
    return x * jax.nn.sigmoid(y)


if __name__ == "__main__":
    key = jax.random.PRNGKey(0)
    k0, k1, k2, k3 = jax.random.split(key, 4)

    # Module has no learnable parameters; only the e_lambda hyperparameter.
    B, C, H, W = 2, 4, 16, 16
    x = jax.random.normal(k0, (B, C, H, W), dtype=jnp.float32)
    out = jax.block_until_ready(simam(x, e_lambda=0.1))
    ref = simam_ref(x, e_lambda=0.1)
    assert out.shape == (B, C, H, W)
    assert jnp.allclose(out, ref, atol=1e-5, rtol=1e-5), "mismatch vs reference"

    # Non-aligned shapes: H*W not a multiple of 128, B*C not a multiple of 8.
    # No host padding / cropping happens on this path anymore.
    x2 = jax.random.normal(k1, (2, 3, 7, 7), dtype=jnp.float32)
    out2 = jax.block_until_ready(simam(x2, e_lambda=0.1))
    ref2 = simam_ref(x2, e_lambda=0.1)
    assert out2.shape == (2, 3, 7, 7)
    assert jnp.allclose(out2, ref2, atol=1e-5, rtol=1e-5), "mismatch (ragged)"

    # Lane-chunked two-pass path (forced with a tiny block budget) with a
    # ragged last lane chunk -> exercises the VMEM guard for large H*W.
    x3 = jax.random.normal(k2, (2, 4, 32, 40), dtype=jnp.float32)
    out3 = jax.block_until_ready(simam(x3, e_lambda=0.1,
                                       target_block_bytes=16 * 1024))
    ref3 = simam_ref(x3, e_lambda=0.1)
    assert out3.shape == (2, 4, 32, 40)
    assert jnp.allclose(out3, ref3, atol=1e-5, rtol=1e-5), "mismatch (chunked)"

    # bf16 input -> dtype-aware (16-row) sublane tiling; stats in f32.
    x4 = jax.random.normal(k3, (2, 8, 16, 16), dtype=jnp.float32).astype(jnp.bfloat16)
    out4 = jax.block_until_ready(simam(x4, e_lambda=0.1))
    ref4 = simam_ref(x4.astype(jnp.float32), e_lambda=0.1)
    assert out4.shape == (2, 8, 16, 16)
    assert jnp.allclose(out4.astype(jnp.float32), ref4, atol=3e-2, rtol=3e-2), \
        "mismatch (bf16)"

    print("KERNEL_OK")
</pallas_src>

<mosaic_0001>
module attributes {stable_mosaic.version = 11 : i64} {
  func.func @_simam_rows_kernel(%arg0: i32, %arg1: memref<8x256xf32, #tpu.memory_space<vmem>>, %arg2: memref<8x256xf32, #tpu.memory_space<vmem>>) attributes {dimension_semantics = [#tpu.dimension_semantics<parallel>], iteration_bounds = array<i64: 1>, scalar_prefetch = 0 : i64, scratch_operands = 0 : i64, tpu.core_type = #tpu.core_type<tc>, window_params = [{transform_indices = @transform_0, window_bounds = array<i64: 8, 256>}, {transform_indices = @transform_1, window_bounds = array<i64: 8, 256>}]} {
    %c0 = arith.constant 0 : index
    %c0_0 = arith.constant 0 : index
    %0 = vector.load %arg1[%c0, %c0_0] : memref<8x256xf32, #tpu.memory_space<vmem>>, vector<8x256xf32>
    %cst = arith.constant dense<0.000000e+00> : vector<8xf32>
    %1 = vector.multi_reduction <add>, %0, %cst [1] : vector<8x256xf32> to vector<8xf32>
    %2 = vector.shape_cast %1 : vector<8xf32> to vector<8x1xf32>
    %3 = arith.mulf %0, %0 : vector<8x256xf32>
    %cst_1 = arith.constant dense<0.000000e+00> : vector<8xf32>
    %4 = vector.multi_reduction <add>, %3, %cst_1 [1] : vector<8x256xf32> to vector<8xf32>
    %5 = vector.shape_cast %4 : vector<8xf32> to vector<8x1xf32>
    %cst_2 = arith.constant 3.906250e-03 : f32
    %6 = vector.broadcast %cst_2 : f32 to vector<8x1xf32>
    %7 = arith.mulf %2, %6 : vector<8x1xf32>
    %8 = arith.mulf %7, %2 : vector<8x1xf32>
    %9 = arith.subf %5, %8 : vector<8x1xf32>
    %cst_3 = arith.constant 0.0156862754 : f32
    %10 = vector.broadcast %cst_3 : f32 to vector<8x1xf32>
    %11 = arith.mulf %9, %10 : vector<8x1xf32>
    %cst_4 = arith.constant 4.000000e-01 : f32
    %12 = vector.broadcast %cst_4 : f32 to vector<8x1xf32>
    %13 = arith.addf %11, %12 : vector<8x1xf32>
    %14 = tpu.reciprocal %13 : vector<8x1xf32> -> vector<8x1xf32>
    %15 = vector.broadcast %7 : vector<8x1xf32> to vector<8x256xf32>
    %16 = arith.subf %0, %15 : vector<8x256xf32>
    %17 = arith.mulf %16, %16 : vector<8x256xf32>
    %18 = vector.broadcast %14 : vector<8x1xf32> to vector<8x256xf32>
    %19 = arith.mulf %17, %18 : vector<8x256xf32>
    %cst_5 = arith.constant 5.000000e-01 : f32
    %20 = vector.broadcast %cst_5 : f32 to vector<8x256xf32>
    %21 = arith.addf %19, %20 : vector<8x256xf32>
    %22 = arith.negf %21 : vector<8x256xf32>
    %23 = math.exp %22 : vector<8x256xf32>
    %cst_6 = arith.constant 1.000000e+00 : f32
    %24 = vector.broadcast %cst_6 : f32 to vector<8x256xf32>
    %25 = arith.addf %24, %23 : vector<8x256xf32>
    %26 = arith.divf %24, %25 : vector<8x256xf32>
    %27 = arith.mulf %0, %26 : vector<8x256xf32>
    %c0_7 = arith.constant 0 : index
    %c0_8 = arith.constant 0 : index
    %28 = vector.load %arg2[%c0_7, %c0_8] : memref<8x256xf32, #tpu.memory_space<vmem>>, vector<8x256xf32>
    tpu.vector_store %arg2[%c0_7, %c0_8], %27 {strides = array<i32>} : memref<8x256xf32, #tpu.memory_space<vmem>>, vector<8x256xf32>,
    return
  }
  func.func @transform_0(%arg0: i32) -> (i32, i32) {
    %c0_i32 = arith.constant 0 : i32
    %c0_i32_0 = arith.constant 0 : i32
    return %arg0, %c0_i32 : i32, i32
  }
  func.func @transform_1(%arg0: i32) -> (i32, i32) {
    %c0_i32 = arith.constant 0 : i32
    %c0_i32_0 = arith.constant 0 : i32
    return %arg0, %c0_i32 : i32, i32
  }
}

</mosaic_0001>

<llo_original>
// kernel: tpu_custom_call.1
$region0: #{tpu_custom_call.1}
  #allocation0 [shape = 'u32[]', space=smem, size = 0x4, offset = 0x4, fixed_abs, tag = 'smem constant byte address 0x4 - core index']
  #allocation1 [shape = 'u32[72,128]{1,0:T(1,128)}', space=vmem, size = 0x9000, scoped, tag = 'internal scratch']
  %s0 = inlined_call_operand.hbm [shape: f32[8,256], index: 0, kind: input, shape index: {}]
  %s1 = inlined_call_operand.hbm [shape: f32[8,256], index: 1, kind: output, shape index: {}]
  %s2 = sld [smem:[#allocation0]]
  $region18: #{tpu_custom_call.1} parent=0
    _
  %s4 = ssub.s32 1, %s2
  %s5 = scalar_select 0, %s4, %s2
  $region1: #{tpu_custom_call.1} parent=0
    #allocation2 [shape = 'u8[8192]{0}', space=vmem, size = 0x2000, scoped, tag = 'input window, operand 0, single buffered']
    #allocation3 [shape = 's32[1]{0}', space=sflag, size = 0x4, scoped, tag = 'scoped memory for tpu_custom_call.1']
    #allocation4 [shape = 's32[1]{0}', space=sflag, size = 0x4, scoped, tag = 'scoped memory for tpu_custom_call.1']
    #allocation5 [shape = 'u8[8192]{0}', space=vmem, size = 0x2000, scoped, tag = 'output window, operand 0, single buffered']
    %6 = vsyncpa [#allocation3], 0
    %7 = vsyncpa [#allocation4], 0
    // Predicated region
    $region2: #{tpu_custom_call.1} parent=1 // pred_check
      _
    $region3: #{tpu_custom_call.1} parent=1 // pred_check_branch
      %9 = sbr.rel (0) target = $region5
    $region4: #{tpu_custom_call.1} parent=1 // pred_region
      %11 = vsyncadd [#allocation3], 0
      %s13 = sshll.u32 %s0, 4
      %s14 = int_to_ptr.hbm [resolvable:$true] %s13
      %s15 = sshll.u32 [#allocation2], 4
      %s16 = int_to_ptr.vmem [resolvable:$true] %s15
      %18 = dma.hbm_to_vmem [thread:$0]  %s14, 256, %s16, [#allocation3]
    $region5: #{tpu_custom_call.1} parent=1 // pred_fallthru
      _
    // Predicated region
    $region6: #{tpu_custom_call.1} parent=1 // pred_check
      _
    $region7: #{tpu_custom_call.1} parent=1 // pred_check_branch
      %20 = sbr.rel (0) target = $region9
    $region8: #{tpu_custom_call.1} parent=1 // pred_region
      %22 = dma.done [#allocation3], 256
    $region9: #{tpu_custom_call.1} parent=1 // pred_fallthru
      _
    %v23 = vld [vmem:[#allocation2] sm:$0xff]
    %v24 = vld [vmem:[#allocation2 + $0x8] sm:$0xff]
    %v25 = vadd.f32 %v23, %v24
    %26 = vadd.xlane.f32.xlu0 %v25
    %v27 = vpop.xlane.xlu0 %26
    %v28 = vmul.f32 %v23, %v23
    %v29 = vmul.f32 %v24, %v24
    %v30 = vadd.f32 %v28, %v29
    %31 = vadd.xlane.f32.xlu0 %v30
    %v32 = vpop.xlane.xlu0 %31
    %v33 = vmul.f32 %v27, 0.00390625
    %v34 = vmul.f32 %v33, %v27
    %v35 = vsub.f32 %v32, %v34
    %v36 = vmul.f32 %v35, 0.015686275
    %v37 = vadd.f32 %v36, 0.4
    %v38 = vrcp.pop %v37
    %v39 = vmul.f32 %v37, %v38
    %v40 = vsub.f32 1.0, %v39
    %v41 = vmul.f32 %v38, %v40
    %v42 = vadd.f32 %v38, %v41
    %vm43 = vweird.f32 %v37
    %vm44 = vweird.f32 %v38
    %vm45 = vmor %vm43, %vm44
    %v46 = vsel %vm45, %v38, %v42
    %v47 = vand.u32 2147483647, %v37
    %vm48 = vcmp.eq.f32.partialorder %v47, 8.507059e+37
    %v49 = vand.u32 %v37, 2147483648
    %v50 = vor.u32 1.1754944e-38, %v49
    %v51 = vsel %vm48, %v50, %v46
    %v52 = vsub.f32 %v23, %v33
    %v53 = vsub.f32 %v24, %v33
    %v54 = vmul.f32 %v52, %v52
    %v55 = vmul.f32 %v53, %v53
    %v56 = vmul.f32 %v54, %v51
    %v57 = vmul.f32 %v55, %v51
    %v58 = vadd.f32 %v56, 0.5
    %v59 = vadd.f32 %v57, 0.5
    %v60 = vxor.u32 %v58, 2147483648
    %v61 = vxor.u32 %v59, 2147483648
    %v62 = vmul.f32 %v60, 1.442695
    %v63 = vpow.pop %v62
    %v64 = vmul.f32 %v61, 1.442695
    %v65 = vpow.pop %v64
    %v66 = vadd.f32 %v63, 1.0
    %v67 = vadd.f32 %v65, 1.0
    %v68 = vrcp.pop %v66
    %v69 = vmul.f32 %v66, %v68
    %v70 = vsub.f32 1.0, %v69
    %v71 = vmul.f32 %v68, %v70
    %v72 = vadd.f32 %v68, %v71
    %vm73 = vweird.f32 %v66
    %vm74 = vweird.f32 %v68
    %vm75 = vmor %vm73, %vm74
    %v76 = vsel %vm75, %v68, %v72
    %v77 = vand.u32 2147483647, %v66
    %vm78 = vcmp.eq.f32.partialorder %v77, 8.507059e+37
    %v79 = vand.u32 %v66, 2147483648
    %v80 = vor.u32 1.1754944e-38, %v79
    %v81 = vsel %vm78, %v80, %v76
    %v82 = vmul.f32 1.0, %v81
    %v83 = vrcp.pop %v67
    %v84 = vmul.f32 %v67, %v83
    %v85 = vsub.f32 1.0, %v84
    %v86 = vmul.f32 %v83, %v85
    %v87 = vadd.f32 %v83, %v86
    %vm88 = vweird.f32 %v67
    %vm89 = vweird.f32 %v83
    %vm90 = vmor %vm88, %vm89
    %v91 = vsel %vm90, %v83, %v87
    %v92 = vand.u32 2147483647, %v67
    %vm93 = vcmp.eq.f32.partialorder %v92, 8.507059e+37
    %v94 = vand.u32 %v67, 2147483648
    %v95 = vor.u32 1.1754944e-38, %v94
    %v96 = vsel %vm93, %v95, %v91
    %v97 = vmul.f32 1.0, %v96
    %v98 = vmul.f32 %v23, %v82
    %v99 = vmul.f32 %v24, %v97
    %100 = vst [vmem:[#allocation5] sm:$0xff] %v98
    %101 = vst [vmem:[#allocation5 + $0x8] sm:$0xff] %v99
    // Predicated region
    $region10: #{tpu_custom_call.1} parent=1 // pred_check
      _
    $region11: #{tpu_custom_call.1} parent=1 // pred_check_branch
      %103 = sbr.rel (0) target = $region13
    $region12: #{tpu_custom_call.1} parent=1 // pred_region
      %105 = vsyncadd [#allocation4], 0
      %s107 = sshll.u32 [#allocation5], 4
      %s108 = int_to_ptr.vmem [resolvable:$true] %s107
      %s109 = sshll.u32 %s1, 4
      %s110 = int_to_ptr.hbm [resolvable:$true] %s109
      %112 = dma.vmem_to_hbm [thread:$0]  %s108, 256, %s110, [#allocation4]
    $region13: #{tpu_custom_call.1} parent=1 // pred_fallthru
      _
    // Predicated region
    $region14: #{tpu_custom_call.1} parent=1 // pred_check
      _
    $region15: #{tpu_custom_call.1} parent=1 // pred_check_branch
      %114 = sbr.rel (0) target = $region17
    $region16: #{tpu_custom_call.1} parent=1 // pred_region
      %116 = dma.done [#allocation4], 256
    $region17: #{tpu_custom_call.1} parent=1 // pred_fallthru
      _
    %117 = vsyncpa [#allocation3], 1
    %118 = vsyncpa [#allocation4], 1

</llo_original>
